<compile_context>
chip_gen: v7x
topology: tpu7x:2x2x1
jax: 0.10.0
libtpu: 0.0.40
codegen_flags: <defaults>
</compile_context>

<pallas_src>
import jax
import jax.numpy as jnp
from jax.experimental import pallas as pl
from jax.experimental.pallas import tpu as pltpu


def _round_up(x, m):
    return ((x + m - 1) // m) * m


def _vmem_capacity_bytes():
    # Physical VMEM per TensorCore: 128 MiB on v5e/v6e, 64 MiB on v7x.
    try:
        return int(pltpu.get_tpu_info().vmem_capacity_bytes)
    except Exception:
        return 64 << 20  # conservative (v7x) fallback


def _linear_kernel(x_ref, w_ref, b_ref, o_ref):
    # x_ref: (bm, dim)      — one batch tile
    # w_ref: (dim, n_way)   — pre-transposed once in the wrapper (VMEM resident)
    # b_ref: (1, n_way)     — f32 (VMEM resident)
    # o_ref: (bm, n_way)    — narrow output, masked stores, minimal HBM writeback
    acc = jnp.dot(x_ref[...], w_ref[...], preferred_element_type=jnp.float32)
    o_ref[...] = (acc + b_ref[...]).astype(o_ref.dtype)


def classifier_forward(x, weight, bias, *, block_rows=512):
    """x: (B, dim); weight: (n_way, dim) (PyTorch layout); bias: (n_way,)."""
    B, dim = x.shape
    n_way = weight.shape[0]

    # One-time, tiny wrapper-side transforms (no per-tile work in the kernel).
    wt = weight.T                                   # (dim, n_way)
    b2 = bias.astype(jnp.float32).reshape(1, n_way)  # f32 bias, (1, n_way)

    x_itemsize = jnp.dtype(x.dtype).itemsize
    w_itemsize = jnp.dtype(wt.dtype).itemsize

    vmem_cap = _vmem_capacity_bytes()
    budget = vmem_cap // 2          # working-set target
    limit_cap = (vmem_cap * 3) // 4  # headroom for Mosaic internal scratch

    def working_set(m):
        # double-buffered x + out tiles, plus the (default double-buffered)
        # resident weight and bias blocks.
        return (2 * m * (dim + n_way) * x_itemsize
                + 2 * dim * n_way * w_itemsize
                + 2 * n_way * 4)

    b8 = _round_up(max(B, 1), 8)
    bm = min(_round_up(block_rows, 8), b8)
    # v7x megacore: make sure both TensorCores get a tile when B is moderate.
    if b8 >= 512:
        bm = min(bm, _round_up(pl.cdiv(b8, 2), 8))
    while bm > 8 and working_set(bm) > budget:
        bm //= 2
    bm = max(8, (bm // 8) * 8)

    grid = (pl.cdiv(B, bm),)  # ragged last block clipped by Pallas — no jnp.pad

    vmem_limit = int(min(max(2 * working_set(bm), 16 << 20), limit_cap))

    out = pl.pallas_call(
        _linear_kernel,
        out_shape=jax.ShapeDtypeStruct((B, n_way), x.dtype),
        grid_spec=pltpu.PrefetchScalarGridSpec(
            num_scalar_prefetch=0,
            grid=grid,
            in_specs=[
                pl.BlockSpec((bm, dim), lambda i: (i, 0)),      # batch-tiled x
                pl.BlockSpec((dim, n_way), lambda i: (0, 0)),   # resident weight^T
                pl.BlockSpec((1, n_way), lambda i: (0, 0)),     # resident f32 bias
            ],
            out_specs=pl.BlockSpec((bm, n_way), lambda i: (i, 0)),
        ),
        compiler_params=pltpu.CompilerParams(
            dimension_semantics=("parallel",),  # shard batch tiles across TCs (v7x)
            vmem_limit_bytes=vmem_limit,
        ),
    )(x, wt, b2)

    return out


if __name__ == "__main__":
    # Small shapes consistent with Classifier(dim, n_way)
    B, dim, n_way = 8, 32, 5

    key = jax.random.PRNGKey(0)
    kx, kw, kb = jax.random.split(key, 3)

    x = jax.random.normal(kx, (B, dim), dtype=jnp.float32)
    # nn.Linear shapes: W (n_way, dim), b (n_way,)
    weight = jax.random.normal(kw, (n_way, dim), dtype=jnp.float32) * (1.0 / jnp.sqrt(dim))
    bias = jax.random.normal(kb, (n_way,), dtype=jnp.float32) * 0.01

    out = classifier_forward(x, weight, bias)
    out = jax.block_until_ready(out)

    ref = x @ weight.T + bias
    assert out.shape == (B, n_way)
    assert jnp.allclose(out, ref, atol=1e-5, rtol=1e-5)

    # bf16 path (f32 accumulation + f32 bias inside the kernel).
    out_bf16 = classifier_forward(
        x.astype(jnp.bfloat16), weight.astype(jnp.bfloat16), bias
    )
    out_bf16 = jax.block_until_ready(out_bf16)
    assert out_bf16.shape == (B, n_way)
    assert jnp.allclose(out_bf16.astype(jnp.float32), ref, atol=1e-1, rtol=1e-1)

    # Ragged-batch path: B not a multiple of the tile, multiple grid steps,
    # no jnp.pad / no output slice.
    B2, dim2, n_way2 = 100, 64, 7
    k2x, k2w, k2b = jax.random.split(jax.random.PRNGKey(1), 3)
    x2 = jax.random.normal(k2x, (B2, dim2), dtype=jnp.float32)
    w2 = jax.random.normal(k2w, (n_way2, dim2), dtype=jnp.float32) * (1.0 / jnp.sqrt(dim2))
    b2 = jax.random.normal(k2b, (n_way2,), dtype=jnp.float32) * 0.01
    out2 = jax.block_until_ready(classifier_forward(x2, w2, b2, block_rows=64))
    ref2 = x2 @ w2.T + b2
    assert out2.shape == (B2, n_way2)
    assert jnp.allclose(out2, ref2, atol=1e-5, rtol=1e-5)

    print("KERNEL_OK")
</pallas_src>

<mosaic_0001>
module attributes {stable_mosaic.version = 11 : i64} {
  func.func @_linear_kernel(%arg0: i32, %arg1: memref<8x32xf32, #tpu.memory_space<vmem>>, %arg2: memref<32x5xf32, #tpu.memory_space<vmem>>, %arg3: memref<1x5xf32, #tpu.memory_space<vmem>>, %arg4: memref<8x5xf32, #tpu.memory_space<vmem>>) attributes {dimension_semantics = [#tpu.dimension_semantics<parallel>], iteration_bounds = array<i64: 1>, scalar_prefetch = 0 : i64, scratch_operands = 0 : i64, tpu.core_type = #tpu.core_type<tc>, window_params = [{transform_indices = @transform_0, window_bounds = array<i64: 8, 32>}, {pipeline_mode = #tpu.pipeline_mode<synchronous>, transform_indices = @transform_1, window_bounds = array<i64: 32, 5>}, {pipeline_mode = #tpu.pipeline_mode<synchronous>, transform_indices = @transform_2, window_bounds = array<i64: 1, 5>}, {transform_indices = @transform_3, window_bounds = array<i64: 8, 5>}]} {
    %c0 = arith.constant 0 : index
    %c0_0 = arith.constant 0 : index
    %0 = vector.load %arg1[%c0, %c0_0] : memref<8x32xf32, #tpu.memory_space<vmem>>, vector<8x32xf32>
    %c0_1 = arith.constant 0 : index
    %c0_2 = arith.constant 0 : index
    %1 = vector.load %arg2[%c0_1, %c0_2] : memref<32x5xf32, #tpu.memory_space<vmem>>, vector<32x5xf32>
    %cst = arith.constant dense<0.000000e+00> : vector<8x5xf32>
    %2 = tpu.matmul %0, %1, %cst {dimension_numbers = #tpu.dot_dimension_numbers<[1], [0], [0], [1], [0, 0, 1, 1], [], []>} : vector<8x32xf32>, vector<32x5xf32>, vector<8x5xf32> -> vector<8x5xf32>
    %c0_3 = arith.constant 0 : index
    %c0_4 = arith.constant 0 : index
    %3 = vector.load %arg3[%c0_3, %c0_4] : memref<1x5xf32, #tpu.memory_space<vmem>>, vector<1x5xf32>
    %4 = vector.broadcast %3 : vector<1x5xf32> to vector<8x5xf32>
    %5 = arith.addf %2, %4 : vector<8x5xf32>
    %c0_5 = arith.constant 0 : index
    %c0_6 = arith.constant 0 : index
    %6 = vector.load %arg4[%c0_5, %c0_6] : memref<8x5xf32, #tpu.memory_space<vmem>>, vector<8x5xf32>
    tpu.vector_store %arg4[%c0_5, %c0_6], %5 {strides = array<i32>} : memref<8x5xf32, #tpu.memory_space<vmem>>, vector<8x5xf32>,
    return
  }
  func.func @transform_0(%arg0: i32) -> (i32, i32) {
    %c0_i32 = arith.constant 0 : i32
    %c0_i32_0 = arith.constant 0 : i32
    return %arg0, %c0_i32 : i32, i32
  }
  func.func @transform_1(%arg0: i32) -> (i32, i32) {
    %c0_i32 = arith.constant 0 : i32
    %c0_i32_0 = arith.constant 0 : i32
    %c0_i32_1 = arith.constant 0 : i32
    return %c0_i32, %c0_i32_0 : i32, i32
  }
  func.func @transform_2(%arg0: i32) -> (i32, i32) {
    %c0_i32 = arith.constant 0 : i32
    %c0_i32_0 = arith.constant 0 : i32
    %c0_i32_1 = arith.constant 0 : i32
    return %c0_i32, %c0_i32_0 : i32, i32
  }
  func.func @transform_3(%arg0: i32) -> (i32, i32) {
    %c0_i32 = arith.constant 0 : i32
    %c0_i32_0 = arith.constant 0 : i32
    return %arg0, %c0_i32 : i32, i32
  }
}

</mosaic_0001>

<llo_original>
// kernel: tpu_custom_call.1
$region0: #{tpu_custom_call.1}
  #allocation0 [shape = 'u32[]', space=smem, size = 0x4, offset = 0x4, fixed_abs, tag = 'smem constant byte address 0x4 - core index']
  #allocation1 [shape = 'u32[144,128]{1,0:T(1,128)}', space=vmem, size = 0x12000, scoped, tag = 'internal scratch']
  %s0 = inlined_call_operand.vmem [shape: f32[8,32], index: 0, kind: input, shape index: {}]
  %s1 = inlined_call_operand.vmem [shape: f32[32,5], index: 1, kind: input, shape index: {}]
  %s2 = inlined_call_operand.vmem [shape: f32[1,5], index: 2, kind: input, shape index: {}]
  %s3 = inlined_call_operand.hbm [shape: f32[8,5], index: 3, kind: output, shape index: {}]
  %s4 = sld [smem:[#allocation0]]
  $region22: #{tpu_custom_call.1} parent=0
    _
  %s6 = ssub.s32 1, %s4
  %s7 = scalar_select 0, %s6, %s4
  $region1: #{tpu_custom_call.1} parent=0
    #allocation2 [shape = 'u8[4096]{0}', space=vmem, size = 0x1000, scoped, tag = 'output window, operand 0, single buffered']
    #allocation3 [shape = 's32[1]{0}', space=sflag, size = 0x4, scoped, tag = 'scoped memory for tpu_custom_call.1']
    %8 = vsyncpa [#allocation3], 0
    // Predicated region
    $region2: #{tpu_custom_call.1} parent=1 // pred_check
      _
    $region3: #{tpu_custom_call.1} parent=1 // pred_check_branch
      %10 = sbr.rel (0) target = $region5
    $region4: #{tpu_custom_call.1} parent=1 // pred_region
      _
    $region5: #{tpu_custom_call.1} parent=1 // pred_fallthru
      _
    // Predicated region
    $region6: #{tpu_custom_call.1} parent=1 // pred_check
      _
    $region7: #{tpu_custom_call.1} parent=1 // pred_check_branch
      %12 = sbr.rel (0) target = $region9
    $region8: #{tpu_custom_call.1} parent=1 // pred_region
      _
    $region9: #{tpu_custom_call.1} parent=1 // pred_fallthru
      _
    // Predicated region
    $region10: #{tpu_custom_call.1} parent=1 // pred_check
      _
    $region11: #{tpu_custom_call.1} parent=1 // pred_check_branch
      %14 = sbr.rel (0) target = $region13
    $region12: #{tpu_custom_call.1} parent=1 // pred_region
      _
    $region13: #{tpu_custom_call.1} parent=1 // pred_fallthru
      _
    %v15 = vld [vmem:[%s0] sm:$0xff]
    %v16 = vld [vmem:[%s1] sm:$0xff]
    %v17 = vld [vmem:[%s1 + $0x8] sm:$0xff]
    %v18 = vld [vmem:[%s1 + $0x10] sm:$0xff]
    %v19 = vld [vmem:[%s1 + $0x18] sm:$0xff]
    %v20 = vld [vmem:[%s2] sm:$0x1]
    %v22 = vlaneseq
    %v23 = vshrl.u32 %v22, 7
    %v24 = vsub.s32 0, %v23
    %v25 = vrot.slane %v20, %v24
    %vm27 = vcmask 261120
    %v29 = vsel %vm27, %v15, 0
    %31 = vmatprep.subr.mxu0 0.0
    %32 = vmatpush1.msra.mxu0 %v16
    %33 = vmatprep.subr.mxu0 0.0
    %34 = vmatpush1.msra.mxu0 %v17
    %35 = vmatprep.subr.mxu0 0.0
    %36 = vmatpush1.msra.mxu0 %v18
    %37 = vmatprep.subr.mxu0 0.0
    %38 = vmatpush1.msra.mxu0 %v19
    %39 = vmatprep.subr.mxu0 0.0
    %40 = vmatpush1.msra.mxu0 0.0
    %41 = vmatprep.subr.mxu0 0.0
    %42 = vmatpush1.msra.mxu0 0.0
    %43 = vmatprep.subr.mxu0 0.0
    %44 = vmatpush1.msra.mxu0 0.0
    %45 = vmatprep.subr.mxu0 0.0
    %46 = vmatpush1.msra.mxu0 0.0
    %47 = vmatprep.subr.mxu0 0.0
    %48 = vmatpush1.msra.mxu0 0.0
    %49 = vmatprep.subr.mxu0 0.0
    %50 = vmatpush1.msra.mxu0 0.0
    %51 = vmatprep.subr.mxu0 0.0
    %52 = vmatpush1.msra.mxu0 0.0
    %53 = vmatprep.subr.mxu0 0.0
    %54 = vmatpush1.msra.mxu0 0.0
    %55 = vmatprep.subr.mxu0 0.0
    %56 = vmatpush1.msra.mxu0 0.0
    %57 = vmatprep.subr.mxu0 0.0
    %58 = vmatpush1.msra.mxu0 0.0
    %59 = vmatprep.subr.mxu0 0.0
    %60 = vmatpush1.msra.mxu0 0.0
    %61 = vmatprep.subr.mxu0 0.0
    %62 = vmatpush1.msra.mxu0 0.0
    %63 = vmatprep.subr.mxu0 0.0
    %64 = vmatpush1.msra.mxu0 0.0
    %65 = vmatprep.subr.mxu0 0.0
    %66 = vmatpush1.msra.mxu0 0.0
    %67 = vmatprep.subr.mxu0 0.0
    %68 = vmatpush1.msra.mxu0 0.0
    %69 = vmatprep.subr.mxu0 0.0
    %70 = vmatpush1.msra.mxu0 0.0
    %71 = vmatprep.subr.mxu0 0.0
    %72 = vmatpush1.msra.mxu0 0.0
    %73 = vmatprep.subr.mxu0 0.0
    %74 = vmatpush1.msra.mxu0 0.0
    %75 = vmatprep.subr.mxu0 0.0
    %76 = vmatpush1.msra.mxu0 0.0
    %77 = vmatprep.subr.mxu0 0.0
    %78 = vmatpush1.msra.mxu0 0.0
    %79 = vmatprep.subr.mxu0 0.0
    %80 = vmatpush1.msra.mxu0 0.0
    %81 = vmatprep.subr.mxu0 0.0
    %82 = vmatpush1.msra.mxu0 0.0
    %83 = vmatprep.subr.mxu0 0.0
    %84 = vmatpush1.msra.mxu0 0.0
    %85 = vmatprep.subr.mxu0 0.0
    %86 = vmatpush1.msra.mxu0 0.0
    %87 = vmatprep.subr.mxu0 0.0
    %88 = vmatpush1.msra.mxu0 0.0
    %89 = vmatprep.subr.mxu0 0.0
    %90 = vmatpush1.msra.mxu0 0.0
    %91 = vmatprep.subr.mxu0 0.0
    %92 = vmatpush1.msra.mxu0 0.0
    %93 = vmatprep.subr.mxu0 0.0
    %94 = vmatpush1.msra.mxu0 0.0
    %95 = vmatprep.mubr.f32.mxu0 0.0
    %96 = vmatmul.mubr.f32.gmra.mrb[0].mxu0 %v29
    %v97 = vpop.f32.mrb[0].mxu0
    %v98 = vadd.f32 %v25, %v97
    %v99 = vpop.f32.mrb[0].mxu0
    %100 = vdwg.mxu0
    %vm101 = vcmask 39936
    %102 = vst.msk [vmem:[#allocation2] sm:$0xff] %vm101, %v98
    // Predicated region
    $region14: #{tpu_custom_call.1} parent=1 // pred_check
      _
    $region15: #{tpu_custom_call.1} parent=1 // pred_check_branch
      %104 = sbr.rel (0) target = $region17
    $region16: #{tpu_custom_call.1} parent=1 // pred_region
      %s106 = ssub.s32 128, 128
      %107 = vsyncadd [#allocation3], %s106
      %s109 = sshll.u32 [#allocation2], 4
      %s110 = int_to_ptr.vmem [resolvable:$true] %s109
      %112 = dma.vmem_to_hbm [thread:$0]  %s110, 128, %s3, [#allocation3]
    $region17: #{tpu_custom_call.1} parent=1 // pred_fallthru
      _
    // Predicated region
    $region18: #{tpu_custom_call.1} parent=1 // pred_check
      _
    $region19: #{tpu_custom_call.1} parent=1 // pred_check_branch
      %114 = sbr.rel (0) target = $region21
    $region20: #{tpu_custom_call.1} parent=1 // pred_region
      %115 = dma.done [#allocation3], 128
    $region21: #{tpu_custom_call.1} parent=1 // pred_fallthru
      _
    %116 = vsyncpa [#allocation3], 1

</llo_original>
